<compile_context>
chip_gen: v7x
topology: tpu7x:2x2x1
jax: 0.10.0
libtpu: 0.0.40
codegen_flags: <defaults>
</compile_context>

<pallas_src>
import jax
import jax.numpy as jnp
from jax import lax
from jax.experimental import pallas as pl
from jax.experimental.pallas import tpu as pltpu


# ----------------------------------------------------------------------------
# Mish math (f32, inside kernels)
# ----------------------------------------------------------------------------
def _mish_f32(x):
    """mish(x) = x * tanh(softplus(x)) = x * t/(t+2), t = e^x*(e^x+2).

    One EUP transcendental (exp) + approximate reciprocal refined with a single
    Newton step on the VPU.  x is clamped to [-30, 20]: above 20 mish(x) == x
    in f32, below -30 mish(x) == 0 in f32; the final select guards x = -inf.
    """
    xc = jnp.clip(x, -30.0, 20.0)
    e = jnp.exp(xc)
    t = e * (e + 2.0)
    d = t + 2.0
    r = pl.reciprocal(d, approx=True)
    r = r * (2.0 - d * r)              # one Newton step -> near-exact 1/d
    return jnp.where(x < -30.0, 0.0, x * (t * r))


# ----------------------------------------------------------------------------
# Pallas kernels
# ----------------------------------------------------------------------------
def _mish_kernel(x_ref, o_ref):
    o_ref[...] = _mish_f32(x_ref[...].astype(jnp.float32)).astype(o_ref.dtype)


def _scale_shift_mish_kernel(x_ref, s_ref, b_ref, o_ref):
    # Fused BN affine (+ folded conv bias) + Mish: mish(x*scale + shift).
    # s_ref / b_ref are (1, width) lane-dense rows broadcast over sublanes.
    x = x_ref[...].astype(jnp.float32)
    y = x * s_ref[...] + b_ref[...]
    o_ref[...] = _mish_f32(y).astype(o_ref.dtype)


def _add3_mish_kernel(a_ref, b_ref, c_ref, o_ref):
    s = (a_ref[...].astype(jnp.float32)
         + b_ref[...].astype(jnp.float32)
         + c_ref[...].astype(jnp.float32))
    o_ref[...] = _mish_f32(s).astype(o_ref.dtype)


# ----------------------------------------------------------------------------
# Generic elementwise launcher: lane-dense 2D slab, big blocks, cdiv grid
# ----------------------------------------------------------------------------
_VMEM_LIMIT_BYTES = 32 << 20       # raise the scoped-VMEM default explicitly
_BLOCK_BUDGET_BYTES = 24 << 20     # target double-buffered VMEM footprint
_SUBLANE = {4: 8, 2: 16, 1: 32}    # itemsize -> sublane packing multiple


def _pick_slab(n, channel_mult=1):
    """Pick (rows, width): widest power-of-two width (>=128) dividing n that is
    also a multiple of channel_mult (so a per-channel (1,width) row aligns)."""
    best = None
    for width in (4096, 2048, 1024, 512, 256, 128):
        if n % width == 0 and width % channel_mult == 0:
            if best is None:
                best = width
            if n // width >= 8:
                return n // width, width
    if best is not None:
        return n // best, best
    return None, None


def _rows_per_block(rows, width, itemsize, n_tiled, sublane):
    """Rows per grid block: as large as the VMEM budget allows, a multiple of
    the dtype's sublane packing, preferring an exact divisor of `rows`
    (unmasked stores, no partial tail) and >=2 / even grid steps (v7x TCs)."""
    budget = _BLOCK_BUDGET_BYTES // (2 * n_tiled)          # double-buffered
    tr = max(sublane, (budget // (width * itemsize)) // sublane * sublane)
    if tr >= rows:
        tr = rows
    else:
        cand = tr
        for _ in range(64):                                # bounded search
            if cand < sublane:
                break
            if rows % cand == 0:
                tr = cand
                break
            cand -= sublane
    steps = -(-rows // tr)
    if steps == 1 and rows > sublane:
        # Guarantee >= 2 grid steps so "parallel" can shard across two TCs.
        half = -(-rows // 2)
        tr = max(sublane, -(-half // sublane) * sublane)
    elif steps > 1 and steps % 2 == 1:
        alt = -(-rows // (steps + 1))
        alt = max(sublane, -(-alt // sublane) * sublane)
        if -(-rows // alt) % 2 == 0:
            tr = alt
    return tr


def _elementwise_pallas(kernel, tiled, broadcast_rows=(), *,
                        flops_per_elem=10, transcendentals_per_elem=1):
    """Run `kernel` over same-shape 2D `tiled` arrays (streamed in row blocks)
    plus optional (1, width) `broadcast_rows` constants."""
    rows, width = tiled[0].shape
    dtype = tiled[0].dtype
    itemsize = dtype.itemsize
    sublane = _SUBLANE.get(itemsize, 8)
    n_tiled = len(tiled) + 1          # streamed inputs + output
    tr = _rows_per_block(rows, width, itemsize, n_tiled, sublane)

    tiled_spec = pl.BlockSpec((tr, width), lambda i: (i, 0))
    row_spec = pl.BlockSpec((1, width), lambda i: (0, 0))
    n = rows * width
    bytes_accessed = (n_tiled * n * itemsize
                      + sum(int(b.size) * b.dtype.itemsize
                            for b in broadcast_rows))

    return pl.pallas_call(
        kernel,
        out_shape=jax.ShapeDtypeStruct((rows, width), dtype),
        grid_spec=pltpu.PrefetchScalarGridSpec(
            num_scalar_prefetch=0,
            grid=(pl.cdiv(rows, tr),),
            in_specs=[tiled_spec] * len(tiled) + [row_spec] * len(broadcast_rows),
            out_specs=tiled_spec,
        ),
        compiler_params=pltpu.CompilerParams(
            dimension_semantics=("parallel",),
            vmem_limit_bytes=_VMEM_LIMIT_BYTES,
        ),
        cost_estimate=pl.CostEstimate(
            flops=flops_per_elem * n,
            transcendentals=transcendentals_per_elem * n,
            bytes_accessed=bytes_accessed,
        ),
    )(*tiled, *broadcast_rows)


# ----------------------------------------------------------------------------
# Public elementwise ops
# ----------------------------------------------------------------------------
def mish(x):
    """Elementwise Mish (Pallas TPU kernel)."""
    shape, n = x.shape, x.size
    rows, width = _pick_slab(n)
    if rows is None:
        # Rare fallback (element count not a multiple of 128): pad + slice.
        width = 128
        rows = pl.cdiv(n, width)
        pad = rows * width - n
        x2 = jnp.pad(jnp.ravel(x), (0, pad)).reshape(rows, width)
        out = _elementwise_pallas(_mish_kernel, [x2])
        return out.reshape(-1)[:n].reshape(shape)
    out = _elementwise_pallas(_mish_kernel, [x.reshape(rows, width)])
    return out.reshape(shape)


def scale_shift_mish(x, scale_c, shift_c):
    """Fused per-channel (last-axis) affine + Mish: mish(x*scale + shift)."""
    shape = x.shape
    C = shape[-1]
    rows, width = _pick_slab(x.size, C)
    if rows is None:
        # TODO(synk): awkward channel count (no lane-dense width is a multiple
        # of C) — apply the affine in XLA (fuses into the conv epilogue) and
        # run the plain Pallas mish.
        return mish(x * scale_c + shift_c)
    # NHWC flattening cycles the channel fastest, and width % C == 0, so every
    # row sees the same channel pattern: a single tiled (1, width) row suffices.
    reps = width // C
    s_row = jnp.tile(scale_c.astype(jnp.float32), reps).reshape(1, width)
    b_row = jnp.tile(shift_c.astype(jnp.float32), reps).reshape(1, width)
    out = _elementwise_pallas(_scale_shift_mish_kernel,
                              [x.reshape(rows, width)], [s_row, b_row],
                              flops_per_elem=12)
    return out.reshape(shape)


def add3_mish(a, b, c):
    """Fused mish(a + b + c) (Pallas TPU kernel)."""
    shape, n = a.shape, a.size
    rows, width = _pick_slab(n)
    if rows is None:
        return mish(a + b + c)
    xs = [v.reshape(rows, width) for v in (a, b, c)]
    out = _elementwise_pallas(_add3_mish_kernel, xs, flops_per_elem=12)
    return out.reshape(shape)


def _mish_ref(x):
    """Pure-JAX reference Mish (numerically-stable softplus + tanh)."""
    xf = x.astype(jnp.float32)
    sp = jnp.maximum(xf, 0.0) + jnp.log1p(jnp.exp(-jnp.abs(xf)))
    return (xf * jnp.tanh(sp)).astype(x.dtype)


# ----------------------------------------------------------------------------
# MoocTrialBlock forward (NHWC convs via XLA; activations via Pallas)
# ----------------------------------------------------------------------------
def _conv2d_nhwc(x, w, b=None, *, padding=0, groups=1):
    out = lax.conv_general_dilated(
        x, w, window_strides=(1, 1),
        padding=((padding, padding), (padding, padding)),
        dimension_numbers=("NHWC", "HWIO", "NHWC"),
        feature_group_count=groups)
    if b is not None:
        out = out + b
    return out


def _bn_affine(bn, conv_bias, eps=1e-5):
    """Fold inference BatchNorm2d + preceding conv bias into scale/shift."""
    inv = bn["gamma"] * lax.rsqrt(bn["var"] + eps)
    shift = bn["beta"] + (conv_bias - bn["mean"]) * inv
    return inv, shift


def init_params(key, c):
    keys = iter(jax.random.split(key, 40))

    def w(kh, kw, cin, cout):
        fan_in = kh * kw * cin
        return (jax.random.normal(next(keys), (kh, kw, cin, cout), jnp.float32)
                / jnp.sqrt(fan_in))

    def b():
        return 0.1 * jax.random.normal(next(keys), (c,), jnp.float32)

    def bn():
        return dict(
            gamma=1.0 + 0.1 * jax.random.normal(next(keys), (c,), jnp.float32),
            beta=0.1 * jax.random.normal(next(keys), (c,), jnp.float32),
            mean=0.1 * jax.random.normal(next(keys), (c,), jnp.float32),
            var=0.5 + 0.5 * jnp.abs(jax.random.normal(next(keys), (c,), jnp.float32)),
        )

    return dict(
        # left flow: 1x1 -> BN -> Mish -> DSConv(3) -> BN -> Mish -> 7x7
        l_c1_w=w(1, 1, c, c), l_c1_b=b(), l_bn1=bn(),
        l_dw_w=w(3, 3, 1, c), l_dw_b=b(),
        l_pw_w=w(1, 1, c, c), l_pw_b=b(), l_bn2=bn(),
        l_c7_w=w(7, 7, c, c), l_c7_b=b(),
        # right flow: 7x7 -> BN -> Mish -> DSConv(3) -> BN -> Mish -> 1x1
        r_c7_w=w(7, 7, c, c), r_c7_b=b(), r_bn1=bn(),
        r_dw_w=w(3, 3, 1, c), r_dw_b=b(),
        r_pw_w=w(1, 1, c, c), r_pw_b=b(), r_bn2=bn(),
        r_c1_w=w(1, 1, c, c), r_c1_b=b(),
    )


def mooc_trial_block(params, x_nchw):
    """Forward pass of MoocTrialBlock.  Input/output are NCHW (PyTorch layout);
    internally everything is NHWC and BN+Mish / add3+Mish run as Pallas kernels."""
    p = params
    c = x_nchw.shape[1]
    x = jnp.transpose(x_nchw, (0, 2, 3, 1))          # one transpose in

    # left flow
    l = _conv2d_nhwc(x, p["l_c1_w"])                                  # 1x1 (bias folded)
    s, sh = _bn_affine(p["l_bn1"], p["l_c1_b"])
    l = scale_shift_mish(l, s, sh)                                    # fused BN + Mish
    l = _conv2d_nhwc(l, p["l_dw_w"], p["l_dw_b"], padding=1, groups=c)  # depthwise 3x3
    l = _conv2d_nhwc(l, p["l_pw_w"])                                  # pointwise 1x1
    s, sh = _bn_affine(p["l_bn2"], p["l_pw_b"])
    l = scale_shift_mish(l, s, sh)
    l = _conv2d_nhwc(l, p["l_c7_w"], p["l_c7_b"], padding=3)          # 7x7

    # right flow
    r = _conv2d_nhwc(x, p["r_c7_w"], padding=3)                       # 7x7 (bias folded)
    s, sh = _bn_affine(p["r_bn1"], p["r_c7_b"])
    r = scale_shift_mish(r, s, sh)
    r = _conv2d_nhwc(r, p["r_dw_w"], p["r_dw_b"], padding=1, groups=c)  # depthwise 3x3
    r = _conv2d_nhwc(r, p["r_pw_w"])                                  # pointwise 1x1
    s, sh = _bn_affine(p["r_bn2"], p["r_pw_b"])
    r = scale_shift_mish(r, s, sh)
    r = _conv2d_nhwc(r, p["r_c1_w"], p["r_c1_b"])                     # 1x1

    out = add3_mish(l, r, x)                         # fused residual sum + Mish
    return jnp.transpose(out, (0, 3, 1, 2))          # one transpose out


def _mooc_trial_block_ref(params, x_nchw):
    """Literal (unfolded) pure-JAX reference matching the PyTorch module."""
    p = params
    c = x_nchw.shape[1]
    x = jnp.transpose(x_nchw, (0, 2, 3, 1))

    def bn(v, st, eps=1e-5):
        inv = st["gamma"] * lax.rsqrt(st["var"] + eps)
        return (v - st["mean"]) * inv + st["beta"]

    l = _conv2d_nhwc(x, p["l_c1_w"], p["l_c1_b"])
    l = _mish_ref(bn(l, p["l_bn1"]))
    l = _conv2d_nhwc(l, p["l_dw_w"], p["l_dw_b"], padding=1, groups=c)
    l = _conv2d_nhwc(l, p["l_pw_w"], p["l_pw_b"])
    l = _mish_ref(bn(l, p["l_bn2"]))
    l = _conv2d_nhwc(l, p["l_c7_w"], p["l_c7_b"], padding=3)

    r = _conv2d_nhwc(x, p["r_c7_w"], p["r_c7_b"], padding=3)
    r = _mish_ref(bn(r, p["r_bn1"]))
    r = _conv2d_nhwc(r, p["r_dw_w"], p["r_dw_b"], padding=1, groups=c)
    r = _conv2d_nhwc(r, p["r_pw_w"], p["r_pw_b"])
    r = _mish_ref(bn(r, p["r_bn2"]))
    r = _conv2d_nhwc(r, p["r_c1_w"], p["r_c1_b"])

    out = _mish_ref(l + r + x)
    return jnp.transpose(out, (0, 3, 1, 2))


if __name__ == "__main__":
    key = jax.random.PRNGKey(0)
    kx, kp = jax.random.split(key)
    N, C, H, W = 2, 4, 16, 16
    x = jax.random.normal(kx, (N, C, H, W), dtype=jnp.float32)
    params = init_params(kp, C)

    fwd = jax.jit(mooc_trial_block)
    y = fwd(params, x)
    jax.block_until_ready(y)
    assert y.shape == x.shape and y.dtype == x.dtype

    # Pallas Mish kernel vs. pure-JAX reference.
    y_mish = mish(x)
    jax.block_until_ready(y_mish)
    assert jnp.allclose(y_mish, _mish_ref(x), atol=1e-4, rtol=1e-4), "mish mismatch"

    # Full block (Pallas, BN/bias folded) vs. literal pure-JAX reference.
    y_ref = jax.jit(_mooc_trial_block_ref)(params, x)
    jax.block_until_ready(y_ref)
    assert jnp.allclose(y, y_ref, atol=1e-4, rtol=1e-4), "block mismatch"

    print("KERNEL_OK")
</pallas_src>

<mosaic_0001>
module attributes {stable_mosaic.version = 11 : i64} {
  func.func @_scale_shift_mish_kernel(%arg0: i32, %arg1: memref<8x256xf32, #tpu.memory_space<vmem>>, %arg2: memref<1x256xf32, #tpu.memory_space<vmem>>, %arg3: memref<1x256xf32, #tpu.memory_space<vmem>>, %arg4: memref<8x256xf32, #tpu.memory_space<vmem>>) attributes {dimension_semantics = [#tpu.dimension_semantics<parallel>], iteration_bounds = array<i64: 1>, scalar_prefetch = 0 : i64, scratch_operands = 0 : i64, tpu.core_type = #tpu.core_type<tc>, window_params = [{transform_indices = @transform_0, window_bounds = array<i64: 8, 256>}, {pipeline_mode = #tpu.pipeline_mode<synchronous>, transform_indices = @transform_1, window_bounds = array<i64: 1, 256>}, {pipeline_mode = #tpu.pipeline_mode<synchronous>, transform_indices = @transform_2, window_bounds = array<i64: 1, 256>}, {transform_indices = @transform_3, window_bounds = array<i64: 8, 256>}]} {
    %c0 = arith.constant 0 : index
    %c0_0 = arith.constant 0 : index
    %0 = vector.load %arg1[%c0, %c0_0] : memref<8x256xf32, #tpu.memory_space<vmem>>, vector<8x256xf32>
    %c0_1 = arith.constant 0 : index
    %c0_2 = arith.constant 0 : index
    %1 = vector.load %arg2[%c0_1, %c0_2] : memref<1x256xf32, #tpu.memory_space<vmem>>, vector<1x256xf32>
    %2 = vector.broadcast %1 : vector<1x256xf32> to vector<8x256xf32>
    %3 = arith.mulf %0, %2 : vector<8x256xf32>
    %c0_3 = arith.constant 0 : index
    %c0_4 = arith.constant 0 : index
    %4 = vector.load %arg3[%c0_3, %c0_4] : memref<1x256xf32, #tpu.memory_space<vmem>>, vector<1x256xf32>
    %5 = vector.broadcast %4 : vector<1x256xf32> to vector<8x256xf32>
    %6 = arith.addf %3, %5 : vector<8x256xf32>
    %cst = arith.constant -3.000000e+01 : f32
    %cst_5 = arith.constant 2.000000e+01 : f32
    %7 = vector.broadcast %cst : f32 to vector<8x256xf32>
    %8 = arith.maximumf %7, %6 : vector<8x256xf32>
    %9 = vector.broadcast %cst_5 : f32 to vector<8x256xf32>
    %10 = arith.minimumf %9, %8 : vector<8x256xf32>
    %11 = math.exp %10 : vector<8x256xf32>
    %cst_6 = arith.constant 2.000000e+00 : f32
    %12 = vector.broadcast %cst_6 : f32 to vector<8x256xf32>
    %13 = arith.addf %11, %12 : vector<8x256xf32>
    %14 = arith.mulf %11, %13 : vector<8x256xf32>
    %cst_7 = arith.constant 2.000000e+00 : f32
    %15 = vector.broadcast %cst_7 : f32 to vector<8x256xf32>
    %16 = arith.addf %14, %15 : vector<8x256xf32>
    %17 = tpu.reciprocal %16 {approx = true} : vector<8x256xf32> -> vector<8x256xf32>
    %18 = arith.mulf %16, %17 : vector<8x256xf32>
    %cst_8 = arith.constant 2.000000e+00 : f32
    %19 = vector.broadcast %cst_8 : f32 to vector<8x256xf32>
    %20 = arith.subf %19, %18 : vector<8x256xf32>
    %21 = arith.mulf %17, %20 : vector<8x256xf32>
    %cst_9 = arith.constant -3.000000e+01 : f32
    %22 = vector.broadcast %cst_9 : f32 to vector<8x256xf32>
    %23 = arith.cmpf olt, %6, %22 : vector<8x256xf32>
    %24 = arith.mulf %14, %21 : vector<8x256xf32>
    %25 = arith.mulf %6, %24 : vector<8x256xf32>
    %cst_10 = arith.constant 0.000000e+00 : f32
    %26 = vector.broadcast %cst_10 : f32 to vector<8x256xf32>
    %27 = arith.select %23, %26, %25 : vector<8x256xi1>, vector<8x256xf32>
    %c0_11 = arith.constant 0 : index
    %c0_12 = arith.constant 0 : index
    %28 = vector.load %arg4[%c0_11, %c0_12] : memref<8x256xf32, #tpu.memory_space<vmem>>, vector<8x256xf32>
    tpu.vector_store %arg4[%c0_11, %c0_12], %27 {strides = array<i32>} : memref<8x256xf32, #tpu.memory_space<vmem>>, vector<8x256xf32>,
    return
  }
  func.func @transform_0(%arg0: i32) -> (i32, i32) {
    %c0_i32 = arith.constant 0 : i32
    %c0_i32_0 = arith.constant 0 : i32
    return %arg0, %c0_i32 : i32, i32
  }
  func.func @transform_1(%arg0: i32) -> (i32, i32) {
    %c0_i32 = arith.constant 0 : i32
    %c0_i32_0 = arith.constant 0 : i32
    %c0_i32_1 = arith.constant 0 : i32
    return %c0_i32, %c0_i32_0 : i32, i32
  }
  func.func @transform_2(%arg0: i32) -> (i32, i32) {
    %c0_i32 = arith.constant 0 : i32
    %c0_i32_0 = arith.constant 0 : i32
    %c0_i32_1 = arith.constant 0 : i32
    return %c0_i32, %c0_i32_0 : i32, i32
  }
  func.func @transform_3(%arg0: i32) -> (i32, i32) {
    %c0_i32 = arith.constant 0 : i32
    %c0_i32_0 = arith.constant 0 : i32
    return %arg0, %c0_i32 : i32, i32
  }
}

module attributes {stable_mosaic.version = 11 : i64} {
  func.func @_add3_mish_kernel(%arg0: i32, %arg1: memref<8x256xf32, #tpu.memory_space<vmem>>, %arg2: memref<8x256xf32, #tpu.memory_space<vmem>>, %arg3: memref<8x256xf32, #tpu.memory_space<vmem>>, %arg4: memref<8x256xf32, #tpu.memory_space<vmem>>) attributes {dimension_semantics = [#tpu.dimension_semantics<parallel>], iteration_bounds = array<i64: 1>, scalar_prefetch = 0 : i64, scratch_operands = 0 : i64, tpu.core_type = #tpu.core_type<tc>, window_params = [{transform_indices = @transform_0, window_bounds = array<i64: 8, 256>}, {transform_indices = @transform_1, window_bounds = array<i64: 8, 256>}, {transform_indices = @transform_2, window_bounds = array<i64: 8, 256>}, {transform_indices = @transform_3, window_bounds = array<i64: 8, 256>}]} {
    %c0 = arith.constant 0 : index
    %c0_0 = arith.constant 0 : index
    %0 = vector.load %arg1[%c0, %c0_0] : memref<8x256xf32, #tpu.memory_space<vmem>>, vector<8x256xf32>
    %c0_1 = arith.constant 0 : index
    %c0_2 = arith.constant 0 : index
    %1 = vector.load %arg2[%c0_1, %c0_2] : memref<8x256xf32, #tpu.memory_space<vmem>>, vector<8x256xf32>
    %2 = arith.addf %0, %1 : vector<8x256xf32>
    %c0_3 = arith.constant 0 : index
    %c0_4 = arith.constant 0 : index
    %3 = vector.load %arg3[%c0_3, %c0_4] : memref<8x256xf32, #tpu.memory_space<vmem>>, vector<8x256xf32>
    %4 = arith.addf %2, %3 : vector<8x256xf32>
    %cst = arith.constant -3.000000e+01 : f32
    %cst_5 = arith.constant 2.000000e+01 : f32
    %5 = vector.broadcast %cst : f32 to vector<8x256xf32>
    %6 = arith.maximumf %5, %4 : vector<8x256xf32>
    %7 = vector.broadcast %cst_5 : f32 to vector<8x256xf32>
    %8 = arith.minimumf %7, %6 : vector<8x256xf32>
    %9 = math.exp %8 : vector<8x256xf32>
    %cst_6 = arith.constant 2.000000e+00 : f32
    %10 = vector.broadcast %cst_6 : f32 to vector<8x256xf32>
    %11 = arith.addf %9, %10 : vector<8x256xf32>
    %12 = arith.mulf %9, %11 : vector<8x256xf32>
    %cst_7 = arith.constant 2.000000e+00 : f32
    %13 = vector.broadcast %cst_7 : f32 to vector<8x256xf32>
    %14 = arith.addf %12, %13 : vector<8x256xf32>
    %15 = tpu.reciprocal %14 {approx = true} : vector<8x256xf32> -> vector<8x256xf32>
    %16 = arith.mulf %14, %15 : vector<8x256xf32>
    %cst_8 = arith.constant 2.000000e+00 : f32
    %17 = vector.broadcast %cst_8 : f32 to vector<8x256xf32>
    %18 = arith.subf %17, %16 : vector<8x256xf32>
    %19 = arith.mulf %15, %18 : vector<8x256xf32>
    %cst_9 = arith.constant -3.000000e+01 : f32
    %20 = vector.broadcast %cst_9 : f32 to vector<8x256xf32>
    %21 = arith.cmpf olt, %4, %20 : vector<8x256xf32>
    %22 = arith.mulf %12, %19 : vector<8x256xf32>
    %23 = arith.mulf %4, %22 : vector<8x256xf32>
    %cst_10 = arith.constant 0.000000e+00 : f32
    %24 = vector.broadcast %cst_10 : f32 to vector<8x256xf32>
    %25 = arith.select %21, %24, %23 : vector<8x256xi1>, vector<8x256xf32>
    %c0_11 = arith.constant 0 : index
    %c0_12 = arith.constant 0 : index
    %26 = vector.load %arg4[%c0_11, %c0_12] : memref<8x256xf32, #tpu.memory_space<vmem>>, vector<8x256xf32>
    tpu.vector_store %arg4[%c0_11, %c0_12], %25 {strides = array<i32>} : memref<8x256xf32, #tpu.memory_space<vmem>>, vector<8x256xf32>,
    return
  }
  func.func @transform_0(%arg0: i32) -> (i32, i32) {
    %c0_i32 = arith.constant 0 : i32
    %c0_i32_0 = arith.constant 0 : i32
    return %arg0, %c0_i32 : i32, i32
  }
  func.func @transform_1(%arg0: i32) -> (i32, i32) {
    %c0_i32 = arith.constant 0 : i32
    %c0_i32_0 = arith.constant 0 : i32
    return %arg0, %c0_i32 : i32, i32
  }
  func.func @transform_2(%arg0: i32) -> (i32, i32) {
    %c0_i32 = arith.constant 0 : i32
    %c0_i32_0 = arith.constant 0 : i32
    return %arg0, %c0_i32 : i32, i32
  }
  func.func @transform_3(%arg0: i32) -> (i32, i32) {
    %c0_i32 = arith.constant 0 : i32
    %c0_i32_0 = arith.constant 0 : i32
    return %arg0, %c0_i32 : i32, i32
  }
}

</mosaic_0001>

<llo_original>
// kernel: tile.63
$region0: #{tile.63}
  #allocation0 [shape = 's32[1]{0}', space=sflag, size = 0x4, scoped, tag = 'scoped memory for tile.63']
  %s0 = inlined_call_operand.vmem [shape: f32[4], index: 0, kind: input, shape index: {}]
  %s1 = inlined_call_operand.vmem [shape: f32[64,4], index: 1, kind: output, shape index: {}]
  // Predicated region
  $region2: #{tile.63} parent=0 // pred_check
    _
  $region3: #{tile.63} parent=0 // pred_check_branch
    %3 = sbr.rel (0) target = $region5
  $region4: #{tile.63} parent=0 // pred_region
    _
  $region5: #{tile.63} parent=0 // pred_fallthru
    _
  %v4 = vld [vmem:[%s0] ss:$0 sm:$0xff]
  %5 = vst [vmem:[%s1] sm:$0xff] %v4
  %s6 = scalar_lea.vmem %s1, 8
  %7 = vst [vmem:[%s6] sm:$0xff] %v4
  %s8 = scalar_lea.vmem %s1, 16
  %9 = vst [vmem:[%s8] sm:$0xff] %v4
  %s10 = scalar_lea.vmem %s1, 24
  %11 = vst [vmem:[%s10] sm:$0xff] %v4
  %s12 = scalar_lea.vmem %s1, 32
  %13 = vst [vmem:[%s12] sm:$0xff] %v4
  %s14 = scalar_lea.vmem %s1, 40
  %15 = vst [vmem:[%s14] sm:$0xff] %v4
  %s16 = scalar_lea.vmem %s1, 48
  %17 = vst [vmem:[%s16] sm:$0xff] %v4
  %s18 = scalar_lea.vmem %s1, 56
  %19 = vst [vmem:[%s18] sm:$0xff] %v4

// kernel: tile.64
$region0: #{tile.64}
  %s0 = inlined_call_operand.vmem [shape: f32[64,4], index: 0, kind: input, shape index: {}]
  %s1 = inlined_call_operand.vmem [shape: f32[1,256], index: 1, kind: output, shape index: {}]
  $region1: #{tile.64} parent=0
    #allocation0 [shape = 'u8[8192]{0}', space=vmem, size = 0x2000, scoped, tag = 'scoped mem for output reshape']
    %v2 = vld [vmem:[%s0] sm:$0x1]
    %s3 = scalar_lea.vmem %s0, 31
    %v4 = vld [vmem:[%s3] sm:$0x2]
    %vm5 = vcmask 1041409
    %v6 = vsel %vm5, %v4, %v2
    %vm7 = vcmask 31744
    %8 = vst.msk [vmem:[#allocation0] ss:$8 sm:$0x3] %vm7, %v6
    %s9 = scalar_lea.vmem %s0, 31
    %v10 = vld [vmem:[%s9] sm:$0x1]
    %s11 = scalar_lea.vmem %s0, 62
    %v12 = vld [vmem:[%s11] sm:$0x2]
    %vm13 = vcmask 1041409
    %v14 = vsel %vm13, %v12, %v10
    %15 = vrot.lane.b32.xlu0 %v14, 124
    %v16 = vpop.permute.xlu0 %15
    %vm17 = vcmask 1048544
    %18 = vst.msk [vmem:[#allocation0] ss:$8 sm:$0x3] %vm17, %v16
    %s19 = scalar_lea.vmem %s0, 30
    %v20 = vld [vmem:[%s19] sm:$0x1]
    %s21 = scalar_lea.vmem %s0, 61
    %v22 = vld [vmem:[%s21] sm:$0x2]
    %vm23 = vcmask 1041409
    %v24 = vsel %vm23, %v22, %v20
    %25 = vrot.lane.b32.xlu0 %v24, 120
    %v26 = vpop.permute.xlu0 %25
    %vm27 = vcmask 1015744
    %28 = vst.msk [vmem:[#allocation0] ss:$8 sm:$0x3] %vm27, %v26
    %s29 = scalar_lea.vmem %s0, 29
    %v30 = vld [vmem:[%s29] sm:$0x1]
    %s31 = scalar_lea.vmem %s0, 60
    %v32 = vld [vmem:[%s31] sm:$0x2]
    %vm33 = vcmask 1041409
    %v34 = vsel %vm33, %v32, %v30
    %35 = vrot.lane.b32.xlu0 %v34, 116
    %v36 = vpop.permute.xlu0 %35
    %vm37 = vcmask 982944
    %38 = vst.msk [vmem:[#allocation0] ss:$8 sm:$0x3] %vm37, %v36
    %s39 = scalar_lea.vmem %s0, 28
    %v40 = vld [vmem:[%s39] sm:$0x1]
    %s41 = scalar_lea.vmem %s0, 59
    %v42 = vld [vmem:[%s41] sm:$0x2]
    %vm43 = vcmask 1041409
    %v44 = vsel %vm43, %v42, %v40
    %45 = vrot.lane.b32.xlu0 %v44, 112
    %v46 = vpop.permute.xlu0 %45
    %vm47 = vcmask 950144
    %48 = vst.msk [vmem:[#allocation0] ss:$8 sm:$0x3] %vm47, %v46
    %s49 = scalar_lea.vmem %s0, 27
    %v50 = vld [vmem:[%s49] sm:$0x1]
    %s51 = scalar_lea.vmem %s0, 58
    %v52 = vld [vmem:[%s51] sm:$0x2]
    %vm53 = vcmask 1041409
    %v54 = vsel %vm53, %v52, %v50
    %55 = vrot.lane.b32.xlu0 %v54, 108
    %v56 = vpop.permute.xlu0 %55
    %vm57 = vcmask 917344
    %58 = vst.msk [vmem:[#allocation0] ss:$8 sm:$0x3] %vm57, %v56
    %s59 = scalar_lea.vmem %s0, 26
    %v60 = vld [vmem:[%s59] sm:$0x1]
    %s61 = scalar_lea.vmem %s0, 57
    %v62 = vld [vmem:[%s61] sm:$0x2]
    %vm63 = vcmask 1041409
    %v64 = vsel %vm63, %v62, %v60
    %65 = vrot.lane.b32.xlu0 %v64, 104
    %v66 = vpop.permute.xlu0 %65
    %vm67 = vcmask 884544
    %68 = vst.msk [vmem:[#allocation0] ss:$8 sm:$0x3] %vm67, %v66
    %s69 = scalar_lea.vmem %s0, 25
    %v70 = vld [vmem:[%s69] sm:$0x1]
    %s71 = scalar_lea.vmem %s0, 56
    %v72 = vld [vmem:[%s71] sm:$0x2]
    %vm73 = vcmask 1041409
    %v74 = vsel %vm73, %v72, %v70
    %75 = vrot.lane.b32.xlu0 %v74, 100
    %v76 = vpop.permute.xlu0 %75
    %vm77 = vcmask 851744
    %78 = vst.msk [vmem:[#allocation0] ss:$8 sm:$0x3] %vm77, %v76
    %s79 = scalar_lea.vmem %s0, 24
    %v80 = vld [vmem:[%s79] sm:$0x1]
    %s81 = scalar_lea.vmem %s0, 55
    %v82 = vld [vmem:[%s81] sm:$0x2]
    %vm83 = vcmask 1041409
    %v84 = vsel %vm83, %v82, %v80
    %85 = vrot.lane.b32.xlu0 %v84, 96
    %v86 = vpop.permute.xlu0 %85
    %vm87 = vcmask 818944
    %88 = vst.msk [vmem:[#allocation0] ss:$8 sm:$0x3] %vm87, %v86
    %s89 = scalar_lea.vmem %s0, 23
    %v90 = vld [vmem:[%s89] sm:$0x1]
    %s91 = scalar_lea.vmem %s0, 54
    %v92 = vld [vmem:[%s91] sm:$0x2]
    %vm93 = vcmask 1041409
    %v94 = vsel %vm93, %v92, %v90
    %95 = vrot.lane.b32.xlu0 %v94, 92
    %v96 = vpop.permute.xlu0 %95
    %vm97 = vcmask 786144
    %98 = vst.msk [vmem:[#allocation0] ss:$8 sm:$0x3] %vm97, %v96
    %s99 = scalar_lea.vmem %s0, 22
    %v100 = vld [vmem:[%s99] sm:$0x1]
    %s101 = scalar_lea.vmem %s0, 53
    %v102 = vld [vmem:[%s101] sm:$0x2]
    %vm103 = vcmask 1041409
    %v104 = vsel %vm103, %v102, %v100
    %105 = vrot.lane.b32.xlu0 %v104, 88
    %v106 = vpop.permute.xlu0 %105
    %vm107 = vcmask 753344
    %108 = vst.msk [vmem:[#allocation0] ss:$8 sm:$0x3] %vm107, %v106
    %s109 = scalar_lea.vmem %s0, 21
    %v110 = vld [vmem:[%s109] sm:$0x1]
    %s111 = scalar_lea.vmem %s0, 52
    %v112 = vld [vmem:[%s111] sm:$0x2]
    %vm113 = vcmask 1041409
    %v114 = vsel %vm113, %v112, %v110
    %115 = vrot.lane.b32.xlu0 %v114, 84
    %v116 = vpop.permute.xlu0 %115
    %vm117 = vcmask 720544
    %118 = vst.msk [vmem:[#allocation0] ss:$8 sm:$0x3] %vm117, %v116
    %s119 = scalar_lea.vmem %s0, 20
    %v120 = vld [vmem:[%s119] sm:$0x1]
    %s121 = scalar_lea.vmem %s0, 51
    %v122 = vld [vmem:[%s121] sm:$0x2]
    %vm123 = vcmask 1041409
    %v124 = vsel %vm123, %v122, %v120
    %125 = vrot.lane.b32.xlu0 %v124, 80
    %v126 = vpop.permute.xlu0 %125
    %vm127 = vcmask 687744
    %128 = vst.msk [vmem:[#allocation0] ss:$8 sm:$0x3] %vm127, %v126
    %s129 = scalar_lea.vmem %s0, 19
    %v130 = vld [vmem:[%s129] sm:$0x1]
    %s131 = scalar_lea.vmem %s0, 50
    %v132 = vld [vmem:[%s131] sm:$0x2]
    %vm133 = vcmask 1041409
    %v134 = vsel %vm133, %v132, %v130
    %135 = vrot.lane.b32.xlu0 %v134, 76
    %v136 = vpop.permute.xlu0 %135
    %vm137 = vcmask 654944
    %138 = vst.msk [vmem:[#allocation0] ss:$8 sm:$0x3] %vm137, %v136
    %s139 = scalar_lea.vmem %s0, 18
    %v140 = vld [vmem:[%s139] sm:$0x1]
    %s141 = scalar_lea.vmem %s0, 49
    %v142 = vld [vmem:[%s141] sm:$0x2]
    %vm143 = vcmask 1041409
    %v144 = vsel %vm143, %v142, %v140
    %145 = vrot.lane.b32.xlu0 %v144, 72
    %v146 = vpop.permute.xlu0 %145
    %vm147 = vcmask 622144
    %148 = vst.msk [vmem:[#allocation0] ss:$8 sm:$0x3] %vm147, %v146
    %s149 = scalar_lea.vmem %s0, 17
    %v150 = vld [vmem:[%s149] sm:$0x1]
    %s151 = scalar_lea.vmem %s0, 48
    %v152 = vld [vmem:[%s151] sm:$0x2]
    %vm153 = vcmask 1041409
    %v154 = vsel %vm153, %v152, %v150
    %155 = vrot.lane.b32.xlu0 %v154, 68
    %v156 = vpop.permute.xlu0 %155
    %vm157 = vcmask 589344
    %158 = vst.msk [vmem:[#allocation0] ss:$8 sm:$0x3] %vm157, %v156
    %s159 = scalar_lea.vmem %s0, 16
    %v160 = vld [vmem:[%s159] sm:$0x1]
    %s161 = scalar_lea.vmem %s0, 47
    %v162 = vld [vmem:[%s161] sm:$0x2]
    %vm163 = vcmask 1041409
    %v164 = vsel %vm163, %v162, %v160
    %165 = vrot.lane.b32.xlu0 %v164, 64
    %v166 = vpop.permute.xlu0 %165
    %vm167 = vcmask 556544
    %168 = vst.msk [vmem:[#allocation0] ss:$8 sm:$0x3] %vm167, %v166
    %s169 = scalar_lea.vmem %s0, 15
    %v170 = vld [vmem:[%s169] sm:$0x1]
    %s171 = scalar_lea.vmem %s0, 46
    %v172 = vld [vmem:[%s171] sm:$0x2]
    %vm173 = vcmask 1041409
    %v174 = vsel %vm173, %v172, %v170
    %175 = vrot.lane.b32.xlu0 %v174, 60
    %v176 = vpop.permute.xlu0 %175
    %vm177 = vcmask 523744
    %178 = vst.msk [vmem:[#allocation0] ss:$8 sm:$0x3] %vm177, %v176
    %s179 = scalar_lea.vmem %s0, 14
    %v180 = vld [vmem:[%s179] sm:$0x1]
    %s181 = scalar_lea.vmem %s0, 45
    %v182 = vld [vmem:[%s181] sm:$0x2]
    %vm183 = vcmask 1041409
    %v184 = vsel %vm183, %v182, %v180
    %185 = vrot.lane.b32.xlu0 %v184, 56
    %v186 = vpop.permute.xlu0 %185
    %vm187 = vcmask 490944
    %188 = vst.msk [vmem:[#allocation0] ss:$8 sm:$0x3] %vm187, %v186
    %s189 = scalar_lea.vmem %s0, 13
    %v190 = vld [vmem:[%s189] sm:$0x1]
    %s191 = scalar_lea.vmem %s0, 44
    %v192 = vld [vmem:[%s191] sm:$0x2]
    %vm193 = vcmask 1041409
    %v194 = vsel %vm193, %v192, %v190
    %195 = vrot.lane.b32.xlu0 %v194, 52
    %v196 = vpop.permute.xlu0 %195
    %vm197 = vcmask 458144
    %198 = vst.msk [vmem:[#allocation0] ss:$8 sm:$0x3] %vm197, %v196
    %s199 = scalar_lea.vmem %s0, 12
    %v200 = vld [vmem:[%s199] sm:$0x1]
    %s201 = scalar_lea.vmem %s0, 43
    %v202 = vld [vmem:[%s201] sm:$0x2]
    %vm203 = vcmask 1041409
    %v204 = vsel %vm203, %v202, %v200
    %205 = vrot.lane.b32.xlu0 %v204, 48
    %v206 = vpop.permute.xlu0 %205
    %vm207 = vcmask 425344
    %208 = vst.msk [vmem:[#allocation0] ss:$8 sm:$0x3] %vm207, %v206
    %s209 = scalar_lea.vmem %s0, 11
    %v210 = vld [vmem:[%s209] sm:$0x1]
    %s211 = scalar_lea.vmem %s0, 42
    %v212 = vld [vmem:[%s211] sm:$0x2]
    %vm213 = vcmask 1041409
    %v214 = vsel %vm213, %v212, %v210
    %215 = vrot.lane.b32.xlu0 %v214, 44
    %v216 = vpop.permute.xlu0 %215
    %vm217 = vcmask 392544
    %218 = vst.msk [vmem:[#allocation0] ss:$8 sm:$0x3] %vm217, %v216
    %s219 = scalar_lea.vmem %s0, 10
    %v220 = vld [vmem:[%s219] sm:$0x1]
    %s221 = scalar_lea.vmem %s0, 41
    %v222 = vld [vmem:[%s221] sm:$0x2]
    %vm223 = vcmask 1041409
    %v224 = vsel %vm223, %v222, %v220
    %225 = vrot.lane.b32.xlu0 %v224, 40
    %v226 = vpop.permute.xlu0 %225
    %vm227 = vcmask 359744
    %228 = vst.msk [vmem:[#allocation0] ss:$8 sm:$0x3] %vm227, %v226
    %s229 = scalar_lea.vmem %s0, 9
    %v230 = vld [vmem:[%s229] sm:$0x1]
    %s231 = scalar_lea.vmem %s0, 40
    %v232 = vld [vmem:[%s231] sm:$0x2]
    %vm233 = vcmask 1041409
    %v234 = vsel %vm233, %v232, %v230
    %235 = vrot.lane.b32.xlu0 %v234, 36
    %v236 = vpop.permute.xlu0 %235
    %vm237 = vcmask 326944
    %238 = vst.msk [vmem:[#allocation0] ss:$8 sm:$0x3] %vm237, %v236
    %s239 = scalar_lea.vmem %s0, 8
    %v240 = vld [vmem:[%s239] sm:$0x1]
    %s241 = scalar_lea.vmem %s0, 39
    %v242 = vld [vmem:[%s241] sm:$0x2]
    %vm243 = vcmask 1041409
    %v244 = vsel %vm243, %v242, %v240
    %245 = vrot.lane.b32.xlu0 %v244, 32
    %v246 = vpop.permute.xlu0 %245
    %vm247 = vcmask 294144
    %248 = vst.msk [vmem:[#allocation0] ss:$8 sm:$0x3] %vm247, %v246
    %s249 = scalar_lea.vmem %s0, 7
    %v250 = vld [vmem:[%s249] sm:$0x1]
    %s251 = scalar_lea.vmem %s0, 38
    %v252 = vld [vmem:[%s251] sm:$0x2]
    %vm253 = vcmask 1041409
    %v254 = vsel %vm253, %v252, %v250
    %255 = vrot.lane.b32.xlu0 %v254, 28
    %v256 = vpop.permute.xlu0 %255
    %vm257 = vcmask 261344
    %258 = vst.msk [vmem:[#allocation0] ss:$8 sm:$0x3] %vm257, %v256
    %s259 = scalar_lea.vmem %s0, 6
    %v260 = vld [vmem:[%s259] sm:$0x1]
    %s261 = scalar_lea.vmem %s0, 37
    %v262 = vld [vmem:[%s261] sm:$0x2]
    %vm263 = vcmask 1041409
    %v264 = vsel %vm263, %v262, %v260
    %265 = vrot.lane.b32.xlu0 %v264, 24
    %v266 = vpop.permute.xlu0 %265
    %vm267 = vcmask 228544
    %268 = vst.msk [vmem:[#allocation0] ss:$8 sm:$0x3] %vm267, %v266
    %s269 = scalar_lea.vmem %s0, 5
    %v270 = vld [vmem:[%s269] sm:$0x1]
    %s271 = scalar_lea.vmem %s0, 36
    %v272 = vld [vmem:[%s271] sm:$0x2]
    %vm273 = vcmask 1041409
    %v274 = vsel %vm273, %v272, %v270
    %275 = vrot.lane.b32.xlu0 %v274, 20
    %v276 = vpop.permute.xlu0 %275
    %vm277 = vcmask 195744
    %278 = vst.msk [vmem:[#allocation0] ss:$8 sm:$0x3] %vm277, %v276
    %s279 = scalar_lea.vmem %s0, 4
    %v280 = vld [vmem:[%s279] sm:$0x1]
    %s281 = scalar_lea.vmem %s0, 35
    %v282 = vld [vmem:[%s281] sm:$0x2]
    %vm283 = vcmask 1041409
    %v284 = vsel %vm283, %v282, %v280
    %285 = vrot.lane.b32.xlu0 %v284, 16
    %v286 = vpop.permute.xlu0 %285
    %vm287 = vcmask 162944
    %288 = vst.msk [vmem:[#allocation0] ss:$8 sm:$0x3] %vm287, %v286
    %s289 = scalar_lea.vmem %s0, 3
    %v290 = vld [vmem:[%s289] sm:$0x1]
    %s291 = scalar_lea.vmem %s0, 34
    %v292 = vld [vmem:[%s291] sm:$0x2]
    %vm293 = vcmask 1041409
    %v294 = vsel %vm293, %v292, %v290
    %295 = vrot.lane.b32.xlu0 %v294, 12
    %v296 = vpop.permute.xlu0 %295
    %vm297 = vcmask 130144
    %298 = vst.msk [vmem:[#allocation0] ss:$8 sm:$0x3] %vm297, %v296
    %s299 = scalar_lea.vmem %s0, 2
    %v300 = vld [vmem:[%s299] sm:$0x1]
    %s301 = scalar_lea.vmem %s0, 33
    %v302 = vld [vmem:[%s301] sm:$0x2]
    %vm303 = vcmask 1041409
    %v304 = vsel %vm303, %v302, %v300
    %305 = vrot.lane.b32.xlu0 %v304, 8
    %v306 = vpop.permute.xlu0 %305
    %vm307 = vcmask 97344
    %308 = vst.msk [vmem:[#allocation0] ss:$8 sm:$0x3] %vm307, %v306
    %s309 = scalar_lea.vmem %s0, 1
    %v310 = vld [vmem:[%s309] sm:$0x1]
    %s311 = scalar_lea.vmem %s0, 32
    %v312 = vld [vmem:[%s311] sm:$0x2]
    %vm313 = vcmask 1041409
    %v314 = vsel %vm313, %v312, %v310
    %315 = vrot.lane.b32.xlu0 %v314, 4
    %v316 = vpop.permute.xlu0 %315
    %vm317 = vcmask 64544
    %318 = vst.msk [vmem:[#allocation0] ss:$8 sm:$0x3] %vm317, %v316
    %s320 = sshllo.u32 0, 1
    %v322 = vld [vmem:[#allocation0] sm:%s320]
    %s323 = sshllo.u32 0, 1
    %324 = vst [vmem:[%s1] sm:%s323] %v322
    %s325 = scalar_lea.vmem [#allocation0], 8
    %v326 = vld [vmem:[%s325] sm:%s320]
    %s327 = sshllo.u32 0, 1
    %s328 = scalar_lea.vmem %s1, 1
    %329 = vst [vmem:[%s328] sm:%s327] %v326

// kernel: mooc_trial_block.7
$region0: #{mooc_trial_block.7}
  #allocation0 [shape = 'u32[]', space=smem, size = 0x4, offset = 0x4, fixed_abs, tag = 'smem constant byte address 0x4 - core index']
  #allocation1 [shape = 'u32[144,128]{1,0:T(1,128)}', space=vmem, size = 0x12000, scoped, tag = 'internal scratch']
  %s0 = inlined_call_operand.vmem [shape: f32[8,256], index: 0, kind: input, shape index: {}]
  %s1 = inlined_call_operand.vmem [shape: f32[1,256], index: 1, kind: input, shape index: {}]
  %s2 = inlined_call_operand.vmem [shape: f32[1,256], index: 2, kind: input, shape index: {}]
  %s3 = inlined_call_operand.vmem [shape: f32[8,256], index: 3, kind: output, shape index: {}]
  %s4 = sld [smem:[#allocation0]]
  $region22: #{mooc_trial_block.7} parent=0
    _
  %s6 = ssub.s32 1, %s4
  %s7 = scalar_select 0, %s6, %s4
  // Predicated region
  $region2: #{mooc_trial_block.7} parent=0 // pred_check
    _
  $region3: #{mooc_trial_block.7} parent=0 // pred_check_branch
    %9 = sbr.rel (0) target = $region5
  $region4: #{mooc_trial_block.7} parent=0 // pred_region
    _
  $region5: #{mooc_trial_block.7} parent=0 // pred_fallthru
    _
  // Predicated region
  $region6: #{mooc_trial_block.7} parent=0 // pred_check
    _
  $region7: #{mooc_trial_block.7} parent=0 // pred_check_branch
    %11 = sbr.rel (0) target = $region9
  $region8: #{mooc_trial_block.7} parent=0 // pred_region
    _
  $region9: #{mooc_trial_block.7} parent=0 // pred_fallthru
    _
  // Predicated region
  $region10: #{mooc_trial_block.7} parent=0 // pred_check
    _
  $region11: #{mooc_trial_block.7} parent=0 // pred_check_branch
    %13 = sbr.rel (0) target = $region13
  $region12: #{mooc_trial_block.7} parent=0 // pred_region
    _
  $region13: #{mooc_trial_block.7} parent=0 // pred_fallthru
    _
  %v14 = vld [vmem:[%s0] sm:$0xff]
  %v15 = vld [vmem:[%s0 + $0x8] sm:$0xff]
  %v16 = vld [vmem:[%s1] sm:$0x3]
  %v18 = vlaneseq
  %v19 = vshrl.u32 %v18, 7
  %v20 = vsub.s32 0, %v19
  %v21 = vrot.slane %v16, %v20
  %v22 = vlaneseq
  %v23 = vshrl.u32 %v22, 7
  %v24 = vsub.s32 1, %v23
  %v25 = vrot.slane %v16, %v24
  %v28 = vmul.f32 %v14, %v21
  %v29 = vmul.f32 %v15, %v25
  %v30 = vld [vmem:[%s2] sm:$0x3]
  %v32 = vlaneseq
  %v33 = vshrl.u32 %v32, 7
  %v34 = vsub.s32 0, %v33
  %v35 = vrot.slane %v30, %v34
  %v36 = vlaneseq
  %v37 = vshrl.u32 %v36, 7
  %v38 = vsub.s32 1, %v37
  %v39 = vrot.slane %v30, %v38
  %v42 = vadd.f32 %v28, %v35
  %v43 = vadd.f32 %v29, %v39
  %v44 = vmax.f32 %v42, -30.0
  %v45 = vmax.f32 %v43, -30.0
  %v46 = vmin.f32 %v44, 20.0
  %v47 = vmin.f32 %v45, 20.0
  %v48 = vmul.f32 %v46, 1.442695
  %v49 = vpow.pop %v48
  %v50 = vmul.f32 %v47, 1.442695
  %v51 = vpow.pop %v50
  %v52 = vadd.f32 %v49, 2.0
  %v53 = vadd.f32 %v51, 2.0
  %v54 = vmul.f32 %v49, %v52
  %v55 = vmul.f32 %v51, %v53
  %v56 = vadd.f32 %v54, 2.0
  %v57 = vadd.f32 %v55, 2.0
  %v58 = vrcp.pop %v56
  %v59 = vrcp.pop %v57
  %v60 = vmul.f32 %v56, %v58
  %v61 = vmul.f32 %v57, %v59
  %v62 = vsub.f32 2.0, %v60
  %v63 = vsub.f32 2.0, %v61
  %v64 = vmul.f32 %v58, %v62
  %v65 = vmul.f32 %v59, %v63
  %vm66 = vcmp.lt.f32.partialorder %v42, -30.0
  %vm67 = vcmp.lt.f32.partialorder %v43, -30.0
  %v68 = vmul.f32 %v54, %v64
  %v69 = vmul.f32 %v55, %v65
  %v70 = vmul.f32 %v42, %v68
  %v71 = vmul.f32 %v43, %v69
  %v72 = vsel %vm66, 0.0, %v70
  %v73 = vsel %vm67, 0.0, %v71
  %74 = vst [vmem:[%s3] sm:$0xff] %v72
  %75 = vst [vmem:[%s3 + $0x8] sm:$0xff] %v73
  // Predicated region
  $region14: #{mooc_trial_block.7} parent=0 // pred_check
    _
  $region15: #{mooc_trial_block.7} parent=0 // pred_check_branch
    %77 = sbr.rel (0) target = $region17
  $region16: #{mooc_trial_block.7} parent=0 // pred_region
    _
  $region17: #{mooc_trial_block.7} parent=0 // pred_fallthru
    _
  // Predicated region
  $region18: #{mooc_trial_block.7} parent=0 // pred_check
    _
  $region19: #{mooc_trial_block.7} parent=0 // pred_check_branch
    %79 = sbr.rel (0) target = $region21
  $region20: #{mooc_trial_block.7} parent=0 // pred_region
    _
  $region21: #{mooc_trial_block.7} parent=0 // pred_fallthru
    _

// kernel: mooc_trial_block.9
$region0: #{mooc_trial_block.9}
  #allocation0 [shape = 'u32[]', space=smem, size = 0x4, offset = 0x4, fixed_abs, tag = 'smem constant byte address 0x4 - core index']
  #allocation1 [shape = 'u32[144,128]{1,0:T(1,128)}', space=vmem, size = 0x12000, scoped, tag = 'internal scratch']
  %s0 = inlined_call_operand.vmem [shape: f32[8,256], index: 0, kind: input, shape index: {}]
  %s1 = inlined_call_operand.vmem [shape: f32[8,256], index: 1, kind: input, shape index: {}]
  %s2 = inlined_call_operand.vmem [shape: f32[8,256], index: 2, kind: input, shape index: {}]
  %s3 = inlined_call_operand.vmem [shape: f32[8,256], index: 3, kind: output, shape index: {}]
  %s4 = sld [smem:[#allocation0]]
  $region22: #{mooc_trial_block.9} parent=0
    _
  %s6 = ssub.s32 1, %s4
  %s7 = scalar_select 0, %s6, %s4
  // Predicated region
  $region2: #{mooc_trial_block.9} parent=0 // pred_check
    _
  $region3: #{mooc_trial_block.9} parent=0 // pred_check_branch
    %9 = sbr.rel (0) target = $region5
  $region4: #{mooc_trial_block.9} parent=0 // pred_region
    _
  $region5: #{mooc_trial_block.9} parent=0 // pred_fallthru
    _
  // Predicated region
  $region6: #{mooc_trial_block.9} parent=0 // pred_check
    _
  $region7: #{mooc_trial_block.9} parent=0 // pred_check_branch
    %11 = sbr.rel (0) target = $region9
  $region8: #{mooc_trial_block.9} parent=0 // pred_region
    _
  $region9: #{mooc_trial_block.9} parent=0 // pred_fallthru
    _
  // Predicated region
  $region10: #{mooc_trial_block.9} parent=0 // pred_check
    _
  $region11: #{mooc_trial_block.9} parent=0 // pred_check_branch
    %13 = sbr.rel (0) target = $region13
  $region12: #{mooc_trial_block.9} parent=0 // pred_region
    _
  $region13: #{mooc_trial_block.9} parent=0 // pred_fallthru
    _
  %v14 = vld [vmem:[%s0] sm:$0xff]
  %v15 = vld [vmem:[%s0 + $0x8] sm:$0xff]
  %v16 = vld [vmem:[%s1] sm:$0xff]
  %v17 = vld [vmem:[%s1 + $0x8] sm:$0xff]
  %v18 = vadd.f32 %v14, %v16
  %v19 = vadd.f32 %v15, %v17
  %v20 = vld [vmem:[%s2] sm:$0xff]
  %v21 = vld [vmem:[%s2 + $0x8] sm:$0xff]
  %v22 = vadd.f32 %v18, %v20
  %v23 = vadd.f32 %v19, %v21
  %v24 = vmax.f32 %v22, -30.0
  %v25 = vmax.f32 %v23, -30.0
  %v26 = vmin.f32 %v24, 20.0
  %v27 = vmin.f32 %v25, 20.0
  %v28 = vmul.f32 %v26, 1.442695
  %v29 = vpow.pop %v28
  %v30 = vmul.f32 %v27, 1.442695
  %v31 = vpow.pop %v30
  %v32 = vadd.f32 %v29, 2.0
  %v33 = vadd.f32 %v31, 2.0
  %v34 = vmul.f32 %v29, %v32
  %v35 = vmul.f32 %v31, %v33
  %v36 = vadd.f32 %v34, 2.0
  %v37 = vadd.f32 %v35, 2.0
  %v38 = vrcp.pop %v36
  %v39 = vrcp.pop %v37
  %v40 = vmul.f32 %v36, %v38
  %v41 = vmul.f32 %v37, %v39
  %v42 = vsub.f32 2.0, %v40
  %v43 = vsub.f32 2.0, %v41
  %v44 = vmul.f32 %v38, %v42
  %v45 = vmul.f32 %v39, %v43
  %vm46 = vcmp.lt.f32.partialorder %v22, -30.0
  %vm47 = vcmp.lt.f32.partialorder %v23, -30.0
  %v48 = vmul.f32 %v34, %v44
  %v49 = vmul.f32 %v35, %v45
  %v50 = vmul.f32 %v22, %v48
  %v51 = vmul.f32 %v23, %v49
  %v52 = vsel %vm46, 0.0, %v50
  %v53 = vsel %vm47, 0.0, %v51
  %54 = vst [vmem:[%s3] sm:$0xff] %v52
  %55 = vst [vmem:[%s3 + $0x8] sm:$0xff] %v53
  // Predicated region
  $region14: #{mooc_trial_block.9} parent=0 // pred_check
    _
  $region15: #{mooc_trial_block.9} parent=0 // pred_check_branch
    %57 = sbr.rel (0) target = $region17
  $region16: #{mooc_trial_block.9} parent=0 // pred_region
    _
  $region17: #{mooc_trial_block.9} parent=0 // pred_fallthru
    _
  // Predicated region
  $region18: #{mooc_trial_block.9} parent=0 // pred_check
    _
  $region19: #{mooc_trial_block.9} parent=0 // pred_check_branch
    %59 = sbr.rel (0) target = $region21
  $region20: #{mooc_trial_block.9} parent=0 // pred_region
    _
  $region21: #{mooc_trial_block.9} parent=0 // pred_fallthru
    _

</llo_original>
